<compile_context>
chip_gen: v5e
topology: v5e:2x2
jax: 0.10.0
libtpu: 0.0.40
codegen_flags: <defaults>
</compile_context>

<pallas_src>
import functools

import jax
import jax.numpy as jnp
from jax import lax
from jax.experimental import pallas as pl
from jax.experimental.pallas import tpu as pltpu


def _codebook_kernel(x_ref, w2h_ref, wt_ref, w_ref, q_ref, idx_ref, sse_ref,
                     *, n_valid, padded):
    """One row-tile of the VQ forward.

    x_ref   : (TN, D) f32   input rows
    w2h_ref : (1,  K) f32   0.5 * ||w_k||^2          (grid-constant, hoisted)
    wt_ref  : (D,  K) f32   codebook, pre-transposed (grid-constant)
    w_ref   : (K,  D) f32   codebook                 (grid-constant)
    q_ref   : (TN, D) f32   quantized rows                      (out)
    idx_ref : (TN, 1) i32   nearest-codeword index              (out)
    sse_ref : (8,  D) f32   per-tile partial sum of (q - x)^2   (out)
    """
    x = x_ref[...]                      # (TN, D)
    wt = wt_ref[...]                    # (D,  K)
    w = w_ref[...]                      # (K,  D)
    w2h = w2h_ref[...]                  # (1,  K)

    tn, _ = x.shape
    k = w.shape[0]

    # argmin_k ||x - w_k||^2 == argmin_k (0.5*||w_k||^2 - x . w_k):
    # the per-row ||x||^2 term and the factor 2 are argmin-invariant.
    # Canonical (M,C)@(C,N) MXU matmul against the pre-transposed codebook,
    # so no per-tile (K,D)->(D,K) transpose can be emitted.
    xw = jnp.dot(x, wt, preferred_element_type=jnp.float32)       # (TN, K)
    score = w2h - xw                                              # (TN, K)

    idx = jnp.argmin(score, axis=1).astype(jnp.int32)             # (TN,)
    # Width-1 store: tiny byte count, kept in natural layout (lane-dense
    # relayout not verified to pay for itself at these shapes).
    idx_ref[...] = idx[:, None]                                   # (TN, 1)

    # one-hot gather on the MXU: encodings @ W  == weight[idx]
    onehot = (lax.broadcasted_iota(jnp.int32, (tn, k), 1)
              == idx[:, None]).astype(jnp.float32)                # (TN, K)
    q = jnp.dot(onehot, w, preferred_element_type=jnp.float32)    # (TN, D)
    q_ref[...] = q        # forward value of x + (q - x).detach() is just q

    # Partial SSE for the loss, folded to an (8, D) block (final tiny
    # reduction + mean happen in the wrapper).
    dd = q - x
    dd = dd * dd                                                  # (TN, D)
    if padded:
        # Rows >= n_valid are zero-padding added by the wrapper: exclude them
        # from the loss (their q/idx rows are harmless and sliced away later).
        row0 = pl.program_id(0) * tn
        rows = lax.broadcasted_iota(jnp.int32, (tn, 1), 0) + row0
        dd = jnp.where(rows < n_valid, dd, 0.0)

    # Log-depth pairwise tree fold along rows.  tn is 8 * 2**p by
    # construction, so every slice boundary is sublane-aligned.
    part = dd
    m = tn
    while m > 8:
        m //= 2
        part = part[:m, :] + part[m:, :]
    sse_ref[...] = part                                           # (8, D)


def _pow2_mult8_floor(x):
    """Largest value of the form 8 * 2**p that is <= max(x, 8)."""
    x = int(max(8, x))
    t = 8
    while t * 2 <= x:
        t *= 2
    return t


def _vmem_limit_bytes():
    """Generation-aware scoped-VMEM limit (64 MiB on v7x, 128 MiB v5e/v6e)."""
    try:
        cap = int(pltpu.get_tpu_info().vmem_capacity_bytes)
    except Exception:
        cap = 64 * 1024 * 1024            # conservative (v7x-sized) fallback
    # ~3/4 of physical, never above 100 MiB: leave headroom for the compiler.
    return min(cap * 3 // 4, 100 * 1024 * 1024)


def codebook_forward(inputs, weight, commitment_cost, *, max_tile_n=8192):
    """inputs: (N, D) f32, weight: (K, D) f32 -> (loss, quantized, indices)."""
    n, d = inputs.shape
    k, d2 = weight.shape
    assert d == d2

    inputs = inputs.astype(jnp.float32)
    weight = weight.astype(jnp.float32)

    vmem_limit = _vmem_limit_bytes()
    budget = vmem_limit * 3 // 5          # tiles + temporaries; keep slack

    # Single-buffer the grid-constant codebook inputs only when they are big
    # enough to matter (reclaims K*D*4 bytes of VMEM; irrelevant at small K).
    single_buffer_consts = (k * d * 4) >= (1 << 20)
    const_bufs = 1 if single_buffer_consts else 2

    lanes = 128
    d_pad = max(d, lanes)                 # VMEM blocks are lane-padded to 128
    k_pad = max(k, lanes)

    # Honest per-row / fixed VMEM accounting:
    #   x and quantized tiles : double-buffered, lane-padded
    #   idx tile              : (TN, 1) i32 lane-pads to 128, double-buffered
    #   live (TN, K) temps    : score, one-hot, iota/compare (~3x)
    per_row = 2 * 2 * d_pad * 4 + 2 * lanes * 4 + 3 * k_pad * 4
    fixed = (const_bufs * (k * d * 4 + d * k * 4)      # W and W^T
             + const_bufs * 8 * k_pad * 4              # 0.5*||w||^2 row
             + 2 * 8 * d_pad * 4)                      # SSE partial blocks
    if fixed > budget:
        # TODO(synk): K-tiled inner "arbitrary" grid axis with running
        # min / best-index scratch for codebooks that exceed VMEM.
        raise ValueError("codebook too large for a VMEM-resident kernel")

    max_rows = max(8, (budget - fixed) // per_row)
    tile_n = _pow2_mult8_floor(min(max_rows, max_tile_n, max(n, 8)))
    # Keep >= 2 grid steps whenever there is enough work, so the "parallel"
    # grid axis can shard across v7x's two TensorCores (inert on v5e/v6e).
    if n >= 16:
        tile_n = min(tile_n, _pow2_mult8_floor((n + 1) // 2))

    num_tiles = -(-n // tile_n)
    n_pad = num_tiles * tile_n
    padded = n_pad != n
    x = jnp.pad(inputs, ((0, n_pad - n), (0, 0))) if padded else inputs

    # Grid-constant operands, computed ONCE (not per grid step):
    w2_half = (0.5 * jnp.sum(weight * weight, axis=1))[None, :]   # (1, K)
    wt = weight.T                                                 # (D, K)

    kernel = functools.partial(_codebook_kernel, n_valid=n, padded=padded)

    def _const_spec(shape):
        if single_buffer_consts:
            return pl.BlockSpec(shape, lambda i: (0, 0),
                                pipeline_mode=pl.Buffered(1))
        return pl.BlockSpec(shape, lambda i: (0, 0))

    quantized, idx, sse_part = pl.pallas_call(
        kernel,
        out_shape=(
            jax.ShapeDtypeStruct((n_pad, d), jnp.float32),             # quantized
            jax.ShapeDtypeStruct((n_pad, 1), jnp.int32),               # indices
            jax.ShapeDtypeStruct((num_tiles * 8, d), jnp.float32),     # SSE partials
        ),
        grid_spec=pltpu.PrefetchScalarGridSpec(
            num_scalar_prefetch=0,
            grid=(num_tiles,),
            in_specs=[
                pl.BlockSpec((tile_n, d), lambda i: (i, 0)),   # input row tile
                _const_spec((1, k)),                           # 0.5*||w||^2
                _const_spec((d, k)),                           # W^T (distances)
                _const_spec((k, d)),                           # W   (gather)
            ],
            out_specs=[
                pl.BlockSpec((tile_n, d), lambda i: (i, 0)),   # quantized tile
                pl.BlockSpec((tile_n, 1), lambda i: (i, 0)),   # indices tile
                pl.BlockSpec((8, d), lambda i: (i, 0)),        # SSE partial
            ],
        ),
        compiler_params=pltpu.CompilerParams(
            dimension_semantics=("parallel",),     # no cross-iteration state
            vmem_limit_bytes=vmem_limit,
        ),
    )(x, w2_half, wt, weight)

    # Tiny final reduction outside the kernel; padded rows were masked, so
    # the mean divides by the true n*d.
    mse = jnp.sum(sse_part) / jnp.float32(n * d)
    loss = (1.0 + commitment_cost) * mse
    return loss, quantized[:n], idx[:n, 0]


def _reference(inputs, weight, commitment_cost):
    dist = (jnp.sum(inputs ** 2, axis=1, keepdims=True)
            + jnp.sum(weight ** 2, axis=1)
            - 2.0 * inputs @ weight.T)
    idx = jnp.argmin(dist, axis=1)
    q = weight[idx]
    mse = jnp.mean((q - inputs) ** 2)
    loss = (1.0 + commitment_cost) * mse
    return loss, q, idx.astype(jnp.int32)


if __name__ == "__main__":
    num_embeddings = 128   # K
    embedding_dim = 32     # D
    commitment_cost = 0.25

    key = jax.random.PRNGKey(0)
    kx, kw = jax.random.split(key)
    # nn.Embedding default init ~ N(0, 1)
    weight = jax.random.normal(kw, (num_embeddings, embedding_dim),
                               dtype=jnp.float32)

    def check(n_rows):
        x = jax.random.normal(jax.random.fold_in(kx, n_rows),
                              (n_rows, embedding_dim), dtype=jnp.float32)
        ref_loss, ref_q, ref_idx = _reference(x, weight, commitment_cost)
        loss, q, idx = codebook_forward(x, weight, commitment_cost)
        jax.block_until_ready((loss, q, idx))
        # NOTE: argmin uses an analytically equivalent but differently-rounded
        # score; exact-index equality could differ on pathological ties.
        assert jnp.allclose(loss, ref_loss, rtol=1e-5, atol=1e-5)
        assert jnp.allclose(q, ref_q, rtol=1e-5, atol=1e-5)
        assert bool(jnp.all(idx == ref_idx))

    check(128)   # batch=16 x seq=8  -> two 64-row tiles (parallel grid)
    check(8)     # single minimal tile, no tree fold
    check(100)   # N not a multiple of 8 -> exercises padding + SSE masking

    print("KERNEL_OK")
</pallas_src>

<mosaic_0001>
module attributes {stable_mosaic.version = 11 : i64} {
  func.func @_codebook_kernel(%arg0: i32, %arg1: memref<64x32xf32, #tpu.memory_space<vmem>>, %arg2: memref<1x128xf32, #tpu.memory_space<vmem>>, %arg3: memref<32x128xf32, #tpu.memory_space<vmem>>, %arg4: memref<128x32xf32, #tpu.memory_space<vmem>>, %arg5: memref<64x32xf32, #tpu.memory_space<vmem>>, %arg6: memref<64x1xi32, #tpu.memory_space<vmem>>, %arg7: memref<8x32xf32, #tpu.memory_space<vmem>>) attributes {dimension_semantics = [#tpu.dimension_semantics<parallel>], iteration_bounds = array<i64: 2>, scalar_prefetch = 0 : i64, scratch_operands = 0 : i64, tpu.core_type = #tpu.core_type<tc>, window_params = [{transform_indices = @transform_0, window_bounds = array<i64: 64, 32>}, {pipeline_mode = #tpu.pipeline_mode<synchronous>, transform_indices = @transform_1, window_bounds = array<i64: 1, 128>}, {pipeline_mode = #tpu.pipeline_mode<synchronous>, transform_indices = @transform_2, window_bounds = array<i64: 32, 128>}, {pipeline_mode = #tpu.pipeline_mode<synchronous>, transform_indices = @transform_3, window_bounds = array<i64: 128, 32>}, {transform_indices = @transform_4, window_bounds = array<i64: 64, 32>}, {transform_indices = @transform_5, window_bounds = array<i64: 64, 1>}, {transform_indices = @transform_6, window_bounds = array<i64: 8, 32>}]} {
    %c0 = arith.constant 0 : index
    %c0_0 = arith.constant 0 : index
    %0 = vector.load %arg1[%c0, %c0_0] : memref<64x32xf32, #tpu.memory_space<vmem>>, vector<64x32xf32>
    %c0_1 = arith.constant 0 : index
    %c0_2 = arith.constant 0 : index
    %1 = vector.load %arg3[%c0_1, %c0_2] : memref<32x128xf32, #tpu.memory_space<vmem>>, vector<32x128xf32>
    %c0_3 = arith.constant 0 : index
    %c0_4 = arith.constant 0 : index
    %2 = vector.load %arg4[%c0_3, %c0_4] : memref<128x32xf32, #tpu.memory_space<vmem>>, vector<128x32xf32>
    %c0_5 = arith.constant 0 : index
    %c0_6 = arith.constant 0 : index
    %3 = vector.load %arg2[%c0_5, %c0_6] : memref<1x128xf32, #tpu.memory_space<vmem>>, vector<1x128xf32>
    %cst = arith.constant dense<0.000000e+00> : vector<64x128xf32>
    %4 = tpu.matmul %0, %1, %cst {dimension_numbers = #tpu.dot_dimension_numbers<[1], [0], [0], [1], [0, 0, 1, 1], [], []>} : vector<64x32xf32>, vector<32x128xf32>, vector<64x128xf32> -> vector<64x128xf32>
    %5 = vector.broadcast %3 : vector<1x128xf32> to vector<64x128xf32>
    %6 = arith.subf %5, %4 : vector<64x128xf32>
    %7 = tpu.reduce_index %6 {axis = 1 : i32, kind = #tpu.reduction_kind<arg_min>} : vector<64x128xf32> -> vector<64xi32>
    %8 = vector.shape_cast %7 : vector<64xi32> to vector<64x1xi32>
    %c0_7 = arith.constant 0 : index
    %c0_8 = arith.constant 0 : index
    %9 = vector.load %arg6[%c0_7, %c0_8] : memref<64x1xi32, #tpu.memory_space<vmem>>, vector<64x1xi32>
    tpu.vector_store %arg6[%c0_7, %c0_8], %8 {strides = array<i32>} : memref<64x1xi32, #tpu.memory_space<vmem>>, vector<64x1xi32>,
    %10 = tpu.iota {dimensions = array<i32: 1>} : vector<64x128xi32>
    %11 = vector.shape_cast %7 : vector<64xi32> to vector<64x1xi32>
    %12 = vector.broadcast %11 : vector<64x1xi32> to vector<64x128xi32>
    %13 = arith.cmpi eq, %10, %12 : vector<64x128xi32>
    %14 = arith.extui %13 : vector<64x128xi1> to vector<64x128xi32>
    %15 = arith.sitofp %14 : vector<64x128xi32> to vector<64x128xf32>
    %cst_9 = arith.constant dense<0.000000e+00> : vector<64x32xf32>
    %16 = tpu.matmul %15, %2, %cst_9 {dimension_numbers = #tpu.dot_dimension_numbers<[1], [0], [0], [1], [0, 0, 1, 1], [], []>} : vector<64x128xf32>, vector<128x32xf32>, vector<64x32xf32> -> vector<64x32xf32>
    %c0_10 = arith.constant 0 : index
    %c0_11 = arith.constant 0 : index
    %17 = vector.load %arg5[%c0_10, %c0_11] : memref<64x32xf32, #tpu.memory_space<vmem>>, vector<64x32xf32>
    tpu.vector_store %arg5[%c0_10, %c0_11], %16 {strides = array<i32>} : memref<64x32xf32, #tpu.memory_space<vmem>>, vector<64x32xf32>,
    %18 = arith.subf %16, %0 : vector<64x32xf32>
    %19 = arith.mulf %18, %18 : vector<64x32xf32>
    %20 = vector.extract_strided_slice %19 {offsets = [0, 0], sizes = [32, 32], strides = [1, 1]} : vector<64x32xf32> to vector<32x32xf32>
    %21 = vector.extract_strided_slice %19 {offsets = [32, 0], sizes = [32, 32], strides = [1, 1]} : vector<64x32xf32> to vector<32x32xf32>
    %22 = arith.addf %20, %21 : vector<32x32xf32>
    %23 = vector.extract_strided_slice %22 {offsets = [0, 0], sizes = [16, 32], strides = [1, 1]} : vector<32x32xf32> to vector<16x32xf32>
    %24 = vector.extract_strided_slice %22 {offsets = [16, 0], sizes = [16, 32], strides = [1, 1]} : vector<32x32xf32> to vector<16x32xf32>
    %25 = arith.addf %23, %24 : vector<16x32xf32>
    %26 = vector.extract_strided_slice %25 {offsets = [0, 0], sizes = [8, 32], strides = [1, 1]} : vector<16x32xf32> to vector<8x32xf32>
    %27 = vector.extract_strided_slice %25 {offsets = [8, 0], sizes = [8, 32], strides = [1, 1]} : vector<16x32xf32> to vector<8x32xf32>
    %28 = arith.addf %26, %27 : vector<8x32xf32>
    %c0_12 = arith.constant 0 : index
    %c0_13 = arith.constant 0 : index
    %29 = vector.load %arg7[%c0_12, %c0_13] : memref<8x32xf32, #tpu.memory_space<vmem>>, vector<8x32xf32>
    tpu.vector_store %arg7[%c0_12, %c0_13], %28 {strides = array<i32>} : memref<8x32xf32, #tpu.memory_space<vmem>>, vector<8x32xf32>,
    return
  }
  func.func @transform_0(%arg0: i32) -> (i32, i32) {
    %c0_i32 = arith.constant 0 : i32
    %c0_i32_0 = arith.constant 0 : i32
    return %arg0, %c0_i32 : i32, i32
  }
  func.func @transform_1(%arg0: i32) -> (i32, i32) {
    %c0_i32 = arith.constant 0 : i32
    %c0_i32_0 = arith.constant 0 : i32
    %c0_i32_1 = arith.constant 0 : i32
    return %c0_i32, %c0_i32_0 : i32, i32
  }
  func.func @transform_2(%arg0: i32) -> (i32, i32) {
    %c0_i32 = arith.constant 0 : i32
    %c0_i32_0 = arith.constant 0 : i32
    %c0_i32_1 = arith.constant 0 : i32
    return %c0_i32, %c0_i32_0 : i32, i32
  }
  func.func @transform_3(%arg0: i32) -> (i32, i32) {
    %c0_i32 = arith.constant 0 : i32
    %c0_i32_0 = arith.constant 0 : i32
    %c0_i32_1 = arith.constant 0 : i32
    return %c0_i32, %c0_i32_0 : i32, i32
  }
  func.func @transform_4(%arg0: i32) -> (i32, i32) {
    %c0_i32 = arith.constant 0 : i32
    %c0_i32_0 = arith.constant 0 : i32
    return %arg0, %c0_i32 : i32, i32
  }
  func.func @transform_5(%arg0: i32) -> (i32, i32) {
    %c0_i32 = arith.constant 0 : i32
    %c0_i32_0 = arith.constant 0 : i32
    return %arg0, %c0_i32 : i32, i32
  }
  func.func @transform_6(%arg0: i32) -> (i32, i32) {
    %c0_i32 = arith.constant 0 : i32
    %c0_i32_0 = arith.constant 0 : i32
    return %arg0, %c0_i32 : i32, i32
  }
}

</mosaic_0001>

<llo_original>
// kernel: tpu_custom_call.1
$region0: #{tpu_custom_call.1}
  #allocation0 [shape = 'u32[]', space=smem, size = 0x4, offset = 0x4, fixed_abs, tag = 'smem constant byte address 0x4 - core index']
  #allocation1 [shape = 'u32[72,128]{1,0:T(1,128)}', space=vmem, size = 0x9000, scoped, tag = 'internal scratch']
  %s0 = inlined_call_operand.vmem [shape: f32[128,32], index: 0, kind: input, shape index: {}]
  %s1 = inlined_call_operand.vmem [shape: f32[1,128], index: 1, kind: input, shape index: {}]
  %s2 = inlined_call_operand.vmem [shape: f32[32,128], index: 2, kind: input, shape index: {}]
  %s3 = inlined_call_operand.vmem [shape: f32[128,32], index: 3, kind: input, shape index: {}]
  %s4 = inlined_call_operand.vmem [shape: f32[128,32], index: 4, kind: output, shape index: {0}]
  %s5 = inlined_call_operand.vmem [shape: s32[128,1], index: 5, kind: output, shape index: {1}]
  %s6 = inlined_call_operand.hbm [shape: f32[16,32], index: 6, kind: output, shape index: {2}]
  %7 = xla_tuple %s4, %s5, %s6
  %s8 = sld [smem:[#allocation0]]
  $region65: #{tpu_custom_call.1} parent=0
    _
  %s10 = ssub.s32 1, %s8
  %s11 = scalar_select 0, %s10, %s8
  $region1: #{tpu_custom_call.1} parent=0
    #allocation2 [shape = 'u8[8192]{0}', space=vmem, size = 0x2000, scoped, tag = 'output window, operand 2']
    #allocation3 [shape = 's32[2]{0}', space=sflag, size = 0x8, scoped, tag = 'scoped memory for tpu_custom_call.1']
    %12 = vsyncpa [#allocation3], 0
    %s13 = scalar_lea.sflag [#allocation3], 1
    %14 = vsyncpa %s13, 0
    loop: start=0, step=1, limit=4
    $region2: #{tpu_custom_call.1} parent=1 // loop_pre_header
      _
    $region3: #{tpu_custom_call.1} parent=1 // loop_header
      %s16 = sphi 0, %s20
      %p17 = scmp.ge.s32.totalorder %s16, 4
      %s26 = sphi 0, %s28
      %s29 = sphi 0, %s26
      %s30 = sphi 0, %s29
      %s46 = sphi 0, %s30
      %s50 = sphi 0, %s50
      %s52 = sphi 0, %s50
      %s53 = sphi 0, %s52
      %s67 = sphi 0, %s53
      %s71 = sphi 0, %s71
      %s73 = sphi 0, %s71
      %s74 = sphi 0, %s73
      %s88 = sphi 0, %s74
      %s92 = sphi 0, %s92
      %s94 = sphi 0, %s92
      %s95 = sphi 0, %s94
      %s109 = sphi 0, %s95
      %s115 = sphi 0, %s117
      %s118 = sphi 0, %s115
      %s119 = sphi 0, %s118
      %s135 = sphi 0, %s119
      %s141 = sphi 0, %s143
      %s144 = sphi 0, %s141
      %s145 = sphi 0, %s144
      %s161 = sphi 0, %s145
      %s167 = sphi 0, %s169
      %s170 = sphi 0, %s167
      %s171 = sphi 0, %s170
      %s187 = sphi 0, %s171
    $region4: #{tpu_custom_call.1} parent=1 // loop_header_branch
      %19 = sbr.rel (%p17) target = $region8
    $region5: #{tpu_custom_call.1} parent=1 // loop_body
      %s21 = ssub.s32 %s16, 1
      %s22 = ssub.s32 %s16, 2
      %s23 = sadd.s32 %s16, 1
      %s24 = ssub.s32 %s16, %s23
      %p25 = scmp.eq.s32.totalorder %s24, 0
      %s27 = sadd.s32 %s26, 1
      %s28 = scalar_select %p25, %s26, %s27
      %p31 = pneg %p25
      %p32 = scmp.eq.s32.totalorder %s16, 1
      %p33 = por %p31, %p32
      %p34 = scmp.ne.s32.totalorder %s26, %s29
      %p35 = scmp.eq.s32.totalorder %s16, 0
      %p36 = por %p34, %p35
      %p37 = scmp.ne.s32.totalorder %s26, %s29
      %p38 = scmp.eq.s32.totalorder %s21, 1
      %p39 = por %p37, %p38
      %p40 = scmp.ne.s32.totalorder %s29, %s30
      %p41 = scmp.eq.s32.totalorder %s21, 0
      %p42 = por %p40, %p41
      %p43 = scmp.ne.s32.totalorder %s29, %s30
      %p44 = scmp.eq.s32.totalorder %s22, 1
      %p45 = por %p43, %p44
      %p47 = scmp.ne.s32.totalorder %s30, %s46
      %p48 = scmp.eq.s32.totalorder %s22, 0
      %p49 = por %p47, %p48
      %s51 = sadd.s32 %s50, 1
      %p54 = scmp.eq.s32.totalorder %s16, 1
      %p55 = scmp.ne.s32.totalorder %s50, %s52
      %p56 = scmp.eq.s32.totalorder %s16, 0
      %p57 = por %p55, %p56
      %p58 = scmp.ne.s32.totalorder %s50, %s52
      %p59 = scmp.eq.s32.totalorder %s21, 1
      %p60 = por %p58, %p59
      %p61 = scmp.ne.s32.totalorder %s52, %s53
      %p62 = scmp.eq.s32.totalorder %s21, 0
      %p63 = por %p61, %p62
      %p64 = scmp.ne.s32.totalorder %s52, %s53
      %p65 = scmp.eq.s32.totalorder %s22, 1
      %p66 = por %p64, %p65
      %p68 = scmp.ne.s32.totalorder %s53, %s67
      %p69 = scmp.eq.s32.totalorder %s22, 0
      %p70 = por %p68, %p69
      %s72 = sadd.s32 %s71, 1
      %p75 = scmp.eq.s32.totalorder %s16, 1
      %p76 = scmp.ne.s32.totalorder %s71, %s73
      %p77 = scmp.eq.s32.totalorder %s16, 0
      %p78 = por %p76, %p77
      %p79 = scmp.ne.s32.totalorder %s71, %s73
      %p80 = scmp.eq.s32.totalorder %s21, 1
      %p81 = por %p79, %p80
      %p82 = scmp.ne.s32.totalorder %s73, %s74
      %p83 = scmp.eq.s32.totalorder %s21, 0
      %p84 = por %p82, %p83
      %p85 = scmp.ne.s32.totalorder %s73, %s74
      %p86 = scmp.eq.s32.totalorder %s22, 1
      %p87 = por %p85, %p86
      %p89 = scmp.ne.s32.totalorder %s74, %s88
      %p90 = scmp.eq.s32.totalorder %s22, 0
      %p91 = por %p89, %p90
      %s93 = sadd.s32 %s92, 1
      %p96 = scmp.eq.s32.totalorder %s16, 1
      %p97 = scmp.ne.s32.totalorder %s92, %s94
      %p98 = scmp.eq.s32.totalorder %s16, 0
      %p99 = por %p97, %p98
      %p100 = scmp.ne.s32.totalorder %s92, %s94
      %p101 = scmp.eq.s32.totalorder %s21, 1
      %p102 = por %p100, %p101
      %p103 = scmp.ne.s32.totalorder %s94, %s95
      %p104 = scmp.eq.s32.totalorder %s21, 0
      %p105 = por %p103, %p104
      %p106 = scmp.ne.s32.totalorder %s94, %s95
      %p107 = scmp.eq.s32.totalorder %s22, 1
      %p108 = por %p106, %p107
      %p110 = scmp.ne.s32.totalorder %s95, %s109
      %p111 = scmp.eq.s32.totalorder %s22, 0
      %p112 = por %p110, %p111
      %s113 = ssub.s32 %s16, %s23
      %p114 = scmp.eq.s32.totalorder %s113, 0
      %s116 = sadd.s32 %s115, 1
      %s117 = scalar_select %p114, %s115, %s116
      %p120 = pneg %p114
      %p121 = scmp.eq.s32.totalorder %s16, 1
      %p122 = por %p120, %p121
      %p123 = scmp.ne.s32.totalorder %s115, %s118
      %p124 = scmp.eq.s32.totalorder %s16, 0
      %p125 = por %p123, %p124
      %p126 = scmp.ne.s32.totalorder %s115, %s118
      %p127 = scmp.eq.s32.totalorder %s21, 1
      %p128 = por %p126, %p127
      %p129 = scmp.ne.s32.totalorder %s118, %s119
      %p130 = scmp.eq.s32.totalorder %s21, 0
      %p131 = por %p129, %p130
      %p132 = scmp.ne.s32.totalorder %s118, %s119
      %p133 = scmp.eq.s32.totalorder %s22, 1
      %p134 = por %p132, %p133
      %p136 = scmp.ne.s32.totalorder %s119, %s135
      %p137 = scmp.eq.s32.totalorder %s22, 0
      %p138 = por %p136, %p137
      %s139 = ssub.s32 %s16, %s23
      %p140 = scmp.eq.s32.totalorder %s139, 0
      %s142 = sadd.s32 %s141, 1
      %s143 = scalar_select %p140, %s141, %s142
      %p146 = pneg %p140
      %p147 = scmp.eq.s32.totalorder %s16, 1
      %p148 = por %p146, %p147
      %p149 = scmp.ne.s32.totalorder %s141, %s144
      %p150 = scmp.eq.s32.totalorder %s16, 0
      %p151 = por %p149, %p150
      %p152 = scmp.ne.s32.totalorder %s141, %s144
      %p153 = scmp.eq.s32.totalorder %s21, 1
      %p154 = por %p152, %p153
      %p155 = scmp.ne.s32.totalorder %s144, %s145
      %p156 = scmp.eq.s32.totalorder %s21, 0
      %p157 = por %p155, %p156
      %p158 = scmp.ne.s32.totalorder %s144, %s145
      %p159 = scmp.eq.s32.totalorder %s22, 1
      %p160 = por %p158, %p159
      %p162 = scmp.ne.s32.totalorder %s145, %s161
      %p163 = scmp.eq.s32.totalorder %s22, 0
      %p164 = por %p162, %p163
      %s165 = ssub.s32 %s16, %s23
      %p166 = scmp.eq.s32.totalorder %s165, 0
      %s168 = sadd.s32 %s167, 1
      %s169 = scalar_select %p166, %s167, %s168
      %p172 = pneg %p166
      %p173 = scmp.eq.s32.totalorder %s16, 1
      %p174 = por %p172, %p173
      %p175 = scmp.ne.s32.totalorder %s167, %s170
      %p176 = scmp.eq.s32.totalorder %s16, 0
      %p177 = por %p175, %p176
      %p178 = scmp.ne.s32.totalorder %s167, %s170
      %p179 = scmp.eq.s32.totalorder %s21, 1
      %p180 = por %p178, %p179
      %p181 = scmp.ne.s32.totalorder %s170, %s171
      %p182 = scmp.eq.s32.totalorder %s21, 0
      %p183 = por %p181, %p182
      %p184 = scmp.ne.s32.totalorder %s170, %s171
      %p185 = scmp.eq.s32.totalorder %s22, 1
      %p186 = por %p184, %p185
      %p188 = scmp.ne.s32.totalorder %s171, %s187
      %p189 = scmp.eq.s32.totalorder %s22, 0
      %p190 = por %p188, %p189
      %p191 = scmp.le.s32.totalorder 1, %s16
      %p192 = scmp.lt.s32.totalorder %s16, 3
      %p193 = pnand %p191, %p192
      %p194 = pneg %p193
      // Predicated region
      $region9: #{tpu_custom_call.1} parent=5 // pred_check
        _
      $region10: #{tpu_custom_call.1} parent=5 // pred_check_branch
        %196 = sbr.rel (%p193) target = $region12
      $region11: #{tpu_custom_call.1} parent=5 // pred_region
        %s197 = ssub.s32 %s16, 1
        // Predicated region
        $region13: #{tpu_custom_call.1} parent=11 // pred_check
          %p198 = pneg %p63
        $region14: #{tpu_custom_call.1} parent=11 // pred_check_branch
          %200 = sbr.rel (%p198) target = $region16
        $region15: #{tpu_custom_call.1} parent=11 // pred_region
          _
        $region16: #{tpu_custom_call.1} parent=11 // pred_fallthru
          _
        // Predicated region
        $region17: #{tpu_custom_call.1} parent=11 // pred_check
          %p201 = pneg %p84
        $region18: #{tpu_custom_call.1} parent=11 // pred_check_branch
          %203 = sbr.rel (%p201) target = $region20
        $region19: #{tpu_custom_call.1} parent=11 // pred_region
          _
        $region20: #{tpu_custom_call.1} parent=11 // pred_fallthru
          _
        // Predicated region
        $region21: #{tpu_custom_call.1} parent=11 // pred_check
          %p204 = pneg %p105
        $region22: #{tpu_custom_call.1} parent=11 // pred_check_branch
          %206 = sbr.rel (%p204) target = $region24
        $region23: #{tpu_custom_call.1} parent=11 // pred_region
          _
        $region24: #{tpu_custom_call.1} parent=11 // pred_fallthru
          _
      $region12: #{tpu_custom_call.1} parent=5 // pred_fallthru
        _
      %p207 = scmp.lt.s32.totalorder %s16, 2
      // Predicated region
      $region25: #{tpu_custom_call.1} parent=5 // pred_check
        %p208 = pneg %p207
      $region26: #{tpu_custom_call.1} parent=5 // pred_check_branch
        %210 = sbr.rel (%p208) target = $region28
      $region27: #{tpu_custom_call.1} parent=5 // pred_region
        // Predicated region
        $region29: #{tpu_custom_call.1} parent=27 // pred_check
          %p211 = pneg %p36
        $region30: #{tpu_custom_call.1} parent=27 // pred_check_branch
          %213 = sbr.rel (%p211) target = $region32
        $region31: #{tpu_custom_call.1} parent=27 // pred_region
          %s214 = smul.u32 8, %s16
          %p215 = scmp.lt.s32.totalorder %s214, 15
          %s216 = scalar_select %p215, %s214, 15
          %s217 = smul.addr %s216, 8
          %s218 = scalar_lea.vmem %s0, %s217
          %s219 = smul.u32 8, %s16
        $region32: #{tpu_custom_call.1} parent=27 // pred_fallthru
          _
      $region28: #{tpu_custom_call.1} parent=5 // pred_fallthru
        _
      %p220 = scmp.le.s32.totalorder 1, %s16
      %p221 = scmp.lt.s32.totalorder %s16, 3
      %p222 = pnand %p220, %p221
      %p223 = pneg %p222
      // Predicated region
      $region33: #{tpu_custom_call.1} parent=5 // pred_check
        _
      $region34: #{tpu_custom_call.1} parent=5 // pred_check_branch
        %225 = sbr.rel (%p222) target = $region36
      $region35: #{tpu_custom_call.1} parent=5 // pred_region
        %s226 = ssub.s32 %s16, 1
        %s227 = smul.u32 8, %s21
        %p228 = scmp.lt.s32.totalorder %s227, 15
        %s229 = scalar_select %p228, %s227, 15
        %s230 = smul.addr %s229, 8
        %s231 = scalar_lea.vmem %s0, %s230
        %p232 = pneg %p42
        %p233 = pneg %p39
        %p234 = pneg %p63
        %p235 = pneg %p60
        %p236 = pneg %p84
        %p237 = pneg %p81
        %p238 = pneg %p105
        %p239 = pneg %p102
        %p240 = pneg %p131
        %p241 = pneg %p128
        %s242 = smul.u32 8, %s21
        %p243 = scmp.lt.s32.totalorder %s242, 15
        %s244 = scalar_select %p243, %s242, 15
        %s245 = smul.addr %s244, 8
        %s246 = scalar_lea.vmem %s4, %s245
        %p247 = pneg %p157
        %p248 = pneg %p154
        %s249 = smul.u32 8, %s21
        %p250 = scmp.lt.s32.totalorder %s249, 15
        %s251 = scalar_select %p250, %s249, 15
        %s252 = smul.addr %s251, 8
        %s253 = scalar_lea.vmem %s5, %s252
        %p254 = pneg %p183
        %p255 = pneg %p180
        %s256 = sand.u32 %s170, 1
        %s257 = scalar_lea.sflag [#allocation3], %s256
        %s258 = sand.u32 %s170, 1
        %s259 = smul.addr %s258, 8
        %s260 = scalar_lea.vmem [#allocation2], %s259
        %s261 = smul.u32 8, %s21
        %p262 = scmp.lt.s32.totalorder %s261, 15
        %s263 = scalar_select %p262, %s261, 15
        %s264 = smul.addr %s263, 8
        %s265 = scalar_lea.vmem %s0, %s264
        %s266 = smul.u32 8, %s21
        %s267 = smul.u32 8, %s21
        %p268 = scmp.lt.s32.totalorder %s267, 15
        %s269 = scalar_select %p268, %s267, 15
        %s270 = smul.addr %s269, 8
        %s271 = scalar_lea.vmem %s4, %s270
        %s272 = smul.u32 8, %s21
        %s273 = smul.u32 8, %s21
        %p274 = scmp.lt.s32.totalorder %s273, 15
        %s275 = scalar_select %p274, %s273, 15
        %s276 = smul.addr %s275, 8
        %s277 = scalar_lea.vmem %s5, %s276
        %s278 = smul.u32 8, %s21
        %v279 = vld [vmem:[%s265] sm:$0xff]
        %v280 = vld [vmem:[%s265 + $0x8] sm:$0xff]
        %v281 = vld [vmem:[%s265 + $0x10] sm:$0xff]
        %v282 = vld [vmem:[%s265 + $0x18] sm:$0xff]
        %v283 = vld [vmem:[%s265 + $0x20] sm:$0xff]
        %v284 = vld [vmem:[%s265 + $0x28] sm:$0xff]
        %v285 = vld [vmem:[%s265 + $0x30] sm:$0xff]
        %v286 = vld [vmem:[%s265 + $0x38] sm:$0xff]
        %v287 = vld [vmem:[%s2] sm:$0xff]
        %v288 = vld [vmem:[%s2 + $0x8] sm:$0xff]
        %v289 = vld [vmem:[%s2 + $0x10] sm:$0xff]
        %v290 = vld [vmem:[%s2 + $0x18] sm:$0xff]
        %v291 = vld [vmem:[%s3] sm:$0xff]
        %v292 = vld [vmem:[%s3 + $0x8] sm:$0xff]
        %v293 = vld [vmem:[%s3 + $0x10] sm:$0xff]
        %v294 = vld [vmem:[%s3 + $0x18] sm:$0xff]
        %v295 = vld [vmem:[%s3 + $0x20] sm:$0xff]
        %v296 = vld [vmem:[%s3 + $0x28] sm:$0xff]
        %v297 = vld [vmem:[%s3 + $0x30] sm:$0xff]
        %v298 = vld [vmem:[%s3 + $0x38] sm:$0xff]
        %v299 = vld [vmem:[%s3 + $0x40] sm:$0xff]
        %v300 = vld [vmem:[%s3 + $0x48] sm:$0xff]
        %v301 = vld [vmem:[%s3 + $0x50] sm:$0xff]
        %v302 = vld [vmem:[%s3 + $0x58] sm:$0xff]
        %v303 = vld [vmem:[%s3 + $0x60] sm:$0xff]
        %v304 = vld [vmem:[%s3 + $0x68] sm:$0xff]
        %v305 = vld [vmem:[%s3 + $0x70] sm:$0xff]
        %v306 = vld [vmem:[%s3 + $0x78] sm:$0xff]
        %v307 = vld [vmem:[%s1] sm:$0x1]
        %vm308 = vcmask 261120
        %v310 = vsel %vm308, %v279, 0
        %v313 = vsel %vm308, %v280, 0
        %v316 = vsel %vm308, %v281, 0
        %v319 = vsel %vm308, %v282, 0
        %v322 = vsel %vm308, %v283, 0
        %v325 = vsel %vm308, %v284, 0
        %v328 = vsel %vm308, %v285, 0
        %v331 = vsel %vm308, %v286, 0
        %333 = vmatpush.msra.mxu0 0.0
        %334 = vmatpush.msra.mxu0 0.0
        %335 = vmatpush.msra.mxu0 0.0
        %336 = vmatpush.msra.mxu0 0.0
        %337 = vmatpush.msra.mxu0 0.0
        %338 = vmatpush.msra.mxu0 0.0
        %339 = vmatpush.msra.mxu0 0.0
        %340 = vmatpush.msra.mxu0 0.0
        %341 = vmatpush.msra.mxu0 0.0
        %342 = vmatpush.msra.mxu0 0.0
        %343 = vmatpush.msra.mxu0 0.0
        %344 = vmatpush.msra.mxu0 0.0
        %345 = vmatpush.msra.mxu0 %v290
        %346 = vmatpush.msra.mxu0 %v289
        %347 = vmatpush.msra.mxu0 %v288
        %348 = vmatpush.msra.mxu0 %v287
        %349 = vmatmul.f32.gmra.mxu0 %v310
        %v350 = vpop.f32.mrf.mxu0
        %v351 = vadd.f32 0.0, %v350
        %352 = vmatmul.f32.gmra.mxu0 %v313
        %v353 = vpop.f32.mrf.mxu0
        %v354 = vadd.f32 0.0, %v353
        %355 = vmatmul.f32.gmra.mxu0 %v316
        %v356 = vpop.f32.mrf.mxu0
        %v357 = vadd.f32 0.0, %v356
        %358 = vmatmul.f32.gmra.mxu0 %v319
        %v359 = vpop.f32.mrf.mxu0
        %v360 = vadd.f32 0.0, %v359
        %361 = vmatmul.f32.gmra.mxu0 %v322
        %v362 = vpop.f32.mrf.mxu0
        %v363 = vadd.f32 0.0, %v362
        %364 = vmatmul.f32.gmra.mxu0 %v325
        %v365 = vpop.f32.mrf.mxu0
        %v366 = vadd.f32 0.0, %v365
        %367 = vmatmul.f32.gmra.mxu0 %v328
        %v368 = vpop.f32.mrf.mxu0
        %v369 = vadd.f32 0.0, %v368
        %370 = vmatmul.f32.gmra.mxu0 %v331
        %v371 = vpop.f32.mrf.mxu0
        %v372 = vadd.f32 0.0, %v371
        %373 = vdwg.mxu0
        %v375 = vperm.slane %v307, 0
        %v377 = vsub.f32 %v375, %v351
        %v378 = vsub.f32 %v375, %v354
        %v379 = vsub.f32 %v375, %v357
        %v380 = vsub.f32 %v375, %v360
        %v381 = vsub.f32 %v375, %v363
        %v382 = vsub.f32 %v375, %v366
        %v383 = vsub.f32 %v375, %v369
        %v384 = vsub.f32 %v375, %v372
        %385 = vmin.index.xlane.f32.xlu0 %v377
        %v386 = vpop.xlane.xlu0 %385
        %387 = vmin.index.xlane.f32.xlu0 %v378
        %v388 = vpop.xlane.xlu0 %387
        %389 = vmin.index.xlane.f32.xlu0 %v379
        %v390 = vpop.xlane.xlu0 %389
        %391 = vmin.index.xlane.f32.xlu0 %v380
        %v392 = vpop.xlane.xlu0 %391
        %393 = vmin.index.xlane.f32.xlu0 %v381
        %v394 = vpop.xlane.xlu0 %393
        %395 = vmin.index.xlane.f32.xlu0 %v382
        %v396 = vpop.xlane.xlu0 %395
        %397 = vmin.index.xlane.f32.xlu0 %v383
        %v398 = vpop.xlane.xlu0 %397
        %399 = vmin.index.xlane.f32.xlu0 %v384
        %v400 = vpop.xlane.xlu0 %399
        %vm401 = vcmask 7168
        %402 = vst.msk [vmem:[%s277] sm:$0xff] %vm401, %v386
        %403 = vst.msk [vmem:[%s277 + $0x8] sm:$0xff] %vm401, %v388
        %404 = vst.msk [vmem:[%s277 + $0x10] sm:$0xff] %vm401, %v390
        %405 = vst.msk [vmem:[%s277 + $0x18] sm:$0xff] %vm401, %v392
        %406 = vst.msk [vmem:[%s277 + $0x20] sm:$0xff] %vm401, %v394
        %407 = vst.msk [vmem:[%s277 + $0x28] sm:$0xff] %vm401, %v396
        %408 = vst.msk [vmem:[%s277 + $0x30] sm:$0xff] %vm401, %v398
        %409 = vst.msk [vmem:[%s277 + $0x38] sm:$0xff] %vm401, %v400
        %v410 = vlaneseq
        %v411 = vand.u32 %v410, 127
        %vm412 = vcmp.eq.s32.totalorder %v411, %v386
        %vm413 = vcmp.eq.s32.totalorder %v411, %v388
        %vm414 = vcmp.eq.s32.totalorder %v411, %v390
        %vm415 = vcmp.eq.s32.totalorder %v411, %v392
        %vm416 = vcmp.eq.s32.totalorder %v411, %v394
        %vm417 = vcmp.eq.s32.totalorder %v411, %v396
        %vm418 = vcmp.eq.s32.totalorder %v411, %v398
        %vm419 = vcmp.eq.s32.totalorder %v411, %v400
        %v420 = vsel %vm412, 1, 0
        %v421 = vsel %vm413, 1, 0
        %v422 = vsel %vm414, 1, 0
        %v423 = vsel %vm415, 1, 0
        %v424 = vsel %vm416, 1, 0
        %v425 = vsel %vm417, 1, 0
        %v426 = vsel %vm418, 1, 0
        %v427 = vsel %vm419, 1, 0
        %v428 = vcvt.s32.f32 %v420
        %v429 = vcvt.s32.f32 %v421
        %v430 = vcvt.s32.f32 %v422
        %v431 = vcvt.s32.f32 %v423
        %v432 = vcvt.s32.f32 %v424
        %v433 = vcvt.s32.f32 %v425
        %v434 = vcvt.s32.f32 %v426
        %v435 = vcvt.s32.f32 %v427
        %436 = vmatpush.msra.mxu0 %v306
        %437 = vmatpush.msra.mxu0 %v305
        %438 = vmatpush.msra.mxu0 %v304
        %439 = vmatpush.msra.mxu0 %v303
        %440 = vmatpush.msra.mxu0 %v302
        %441 = vmatpush.msra.mxu0 %v301
        %442 = vmatpush.msra.mxu0 %v300
        %443 = vmatpush.msra.mxu0 %v299
        %444 = vmatpush.msra.mxu0 %v298
        %445 = vmatpush.msra.mxu0 %v297
        %446 = vmatpush.msra.mxu0 %v296
        %447 = vmatpush.msra.mxu0 %v295
        %448 = vmatpush.msra.mxu0 %v294
        %449 = vmatpush.msra.mxu0 %v293
        %450 = vmatpush.msra.mxu0 %v292
        %451 = vmatpush.msra.mxu0 %v291
        %452 = vmatmul.f32.gmra.mxu0 %v428
        %v453 = vpop.f32.mrf.mxu0
        %v454 = vadd.f32 0.0, %v453
        %455 = vmatmul.f32.gmra.mxu0 %v429
        %v456 = vpop.f32.mrf.mxu0
        %v457 = vadd.f32 0.0, %v456
        %458 = vmatmul.f32.gmra.mxu0 %v430
        %v459 = vpop.f32.mrf.mxu0
        %v460 = vadd.f32 0.0, %v459
        %461 = vmatmul.f32.gmra.mxu0 %v431
        %v462 = vpop.f32.mrf.mxu0
        %v463 = vadd.f32 0.0, %v462
        %464 = vmatmul.f32.gmra.mxu0 %v432
        %v465 = vpop.f32.mrf.mxu0
        %v466 = vadd.f32 0.0, %v465
        %467 = vmatmul.f32.gmra.mxu0 %v433
        %v468 = vpop.f32.mrf.mxu0
        %v469 = vadd.f32 0.0, %v468
        %470 = vmatmul.f32.gmra.mxu0 %v434
        %v471 = vpop.f32.mrf.mxu0
        %v472 = vadd.f32 0.0, %v471
        %473 = vmatmul.f32.gmra.mxu0 %v435
        %v474 = vpop.f32.mrf.mxu0
        %v475 = vadd.f32 0.0, %v474
        %476 = vdwg.mxu0
        %477 = vst.msk [vmem:[%s271] sm:$0xff] %vm308, %v454
        %478 = vst.msk [vmem:[%s271 + $0x8] sm:$0xff] %vm308, %v457
        %479 = vst.msk [vmem:[%s271 + $0x10] sm:$0xff] %vm308, %v460
        %480 = vst.msk [vmem:[%s271 + $0x18] sm:$0xff] %vm308, %v463
        %481 = vst.msk [vmem:[%s271 + $0x20] sm:$0xff] %vm308, %v466
        %482 = vst.msk [vmem:[%s271 + $0x28] sm:$0xff] %vm308, %v469
        %483 = vst.msk [vmem:[%s271 + $0x30] sm:$0xff] %vm308, %v472
        %484 = vst.msk [vmem:[%s271 + $0x38] sm:$0xff] %vm308, %v475
        %v485 = vsub.f32 %v454, %v279
        %v486 = vsub.f32 %v457, %v280
        %v487 = vsub.f32 %v460, %v281
        %v488 = vsub.f32 %v463, %v282
        %v489 = vsub.f32 %v466, %v283
        %v490 = vsub.f32 %v469, %v284
        %v491 = vsub.f32 %v472, %v285
        %v492 = vsub.f32 %v475, %v286
        %v493 = vmul.f32 %v485, %v485
        %v494 = vmul.f32 %v486, %v486
        %v495 = vmul.f32 %v487, %v487
        %v496 = vmul.f32 %v488, %v488
        %v497 = vmul.f32 %v489, %v489
        %v498 = vmul.f32 %v490, %v490
        %v499 = vmul.f32 %v491, %v491
        %v500 = vmul.f32 %v492, %v492
        %v501 = vadd.f32 %v493, %v497
        %v502 = vadd.f32 %v494, %v498
        %v503 = vadd.f32 %v495, %v499
        %v504 = vadd.f32 %v496, %v500
        %v505 = vadd.f32 %v501, %v503
        %v506 = vadd.f32 %v502, %v504
        %v507 = vadd.f32 %v505, %v506
        %508 = vst.msk [vmem:[%s260] sm:$0xff] %vm308, %v507
        %s509 = smul.u32 8, %s21
        %p510 = scmp.lt.s32.totalorder %s509, 15
        %s511 = scalar_select %p510, %s509, 15
        %s512 = smul.addr %s511, 8
        %s513 = scalar_lea.vmem %s4, %s512
        %s514 = smul.u32 8, %s21
        %p515 = scmp.lt.s32.totalorder %s514, 15
        %s516 = scalar_select %p515, %s514, 15
        %s517 = smul.addr %s516, 8
        %s518 = scalar_lea.vmem %s5, %s517
        %s519 = sand.u32 %s170, 1
        %s520 = scalar_lea.sflag [#allocation3], %s519
        %s521 = sand.u32 %s170, 1
        %s522 = smul.addr %s521, 8
        %s523 = scalar_lea.vmem [#allocation2], %s522
        // Predicated region
        $region37: #{tpu_custom_call.1} parent=35 // pred_check
          %p524 = pneg %p128
        $region38: #{tpu_custom_call.1} parent=35 // pred_check_branch
          %526 = sbr.rel (%p524) target = $region40
        $region39: #{tpu_custom_call.1} parent=35 // pred_region
          %s527 = smul.u32 8, %s21
        $region40: #{tpu_custom_call.1} parent=35 // pred_fallthru
          _
        // Predicated region
        $region41: #{tpu_custom_call.1} parent=35 // pred_check
          %p528 = pneg %p154
        $region42: #{tpu_custom_call.1} parent=35 // pred_check_branch
          %530 = sbr.rel (%p528) target = $region44
        $region43: #{tpu_custom_call.1} parent=35 // pred_region
          %s531 = smul.u32 8, %s21
        $region44: #{tpu_custom_call.1} parent=35 // pred_fallthru
          _
        // Predicated region
        $region45: #{tpu_custom_call.1} parent=35 // pred_check
          %p532 = pneg %p180
        $region46: #{tpu_custom_call.1} parent=35 // pred_check_branch
          %534 = sbr.rel (%p532) target = $region48
        $region47: #{tpu_custom_call.1} parent=35 // pred_region
          %536 = vsyncadd %s520, 0
          %s537 = smul.addr %s21, 8
          %s538 = scalar_lea.hbm %s6, %s537
          %s540 = sshll.u32 %s523, 4
          %s541 = int_to_ptr.vmem [resolvable:$true] %s540
          %s542 = sshll.u32 %s538, 4
          %s543 = int_to_ptr.hbm [resolvable:$true] %s542
          %545 = dma.vmem_to_hbm [thread:$0]  %s541, 128, %s543, %s520
        $region48: #{tpu_custom_call.1} parent=35 // pred_fallthru
          _
      $region36: #{tpu_custom_call.1} parent=5 // pred_fallthru
        _
      %p546 = scmp.le.s32.totalorder 2, %s16
      // Predicated region
      $region49: #{tpu_custom_call.1} parent=5 // pred_check
        %p547 = pneg %p546
      $region50: #{tpu_custom_call.1} parent=5 // pred_check_branch
        %549 = sbr.rel (%p547) target = $region52
      $region51: #{tpu_custom_call.1} parent=5 // pred_region
        %s550 = ssub.s32 %s16, 2
        // Predicated region
        $region53: #{tpu_custom_call.1} parent=51 // pred_check
          %p551 = pneg %p134
        $region54: #{tpu_custom_call.1} parent=51 // pred_check_branch
          %553 = sbr.rel (%p551) target = $region56
        $region55: #{tpu_custom_call.1} parent=51 // pred_region
          %s554 = smul.u32 8, %s22
          %p555 = scmp.lt.s32.totalorder %s554, 15
          %s556 = scalar_select %p555, %s554, 15
          %s557 = smul.addr %s556, 8
          %s558 = scalar_lea.vmem %s4, %s557
        $region56: #{tpu_custom_call.1} parent=51 // pred_fallthru
          _
        // Predicated region
        $region57: #{tpu_custom_call.1} parent=51 // pred_check
          %p559 = pneg %p160
        $region58: #{tpu_custom_call.1} parent=51 // pred_check_branch
          %561 = sbr.rel (%p559) target = $region60
        $region59: #{tpu_custom_call.1} parent=51 // pred_region
          %s562 = smul.u32 8, %s22
          %p563 = scmp.lt.s32.totalorder %s562, 15
          %s564 = scalar_select %p563, %s562, 15
          %s565 = smul.addr %s564, 8
          %s566 = scalar_lea.vmem %s5, %s565
        $region60: #{tpu_custom_call.1} parent=51 // pred_fallthru
          _
        // Predicated region
        $region61: #{tpu_custom_call.1} parent=51 // pred_check
          %p567 = pneg %p186
        $region62: #{tpu_custom_call.1} parent=51 // pred_check_branch
          %569 = sbr.rel (%p567) target = $region64
        $region63: #{tpu_custom_call.1} parent=51 // pred_region
          %s570 = sand.u32 %s171, 1
          %s571 = scalar_lea.sflag [#allocation3], %s570
          %s572 = sand.u32 %s171, 1
          %s573 = smul.addr %s572, 8
          %s574 = scalar_lea.vmem [#allocation2], %s573
          %576 = dma.done %s571, 128
        $region64: #{tpu_custom_call.1} parent=51 // pred_fallthru
          _
      $region52: #{tpu_custom_call.1} parent=5 // pred_fallthru
        _
    $region6: #{tpu_custom_call.1} parent=1 // loop_footer
      %s20 = sadd.s32 1, %s16
    $region7: #{tpu_custom_call.1} parent=1 // loop_footer_branch
      %15 = sbr.rel target = $region3
    $region8: #{tpu_custom_call.1} parent=1 // loop_exit
      _
    %577 = vsyncpa [#allocation3], 1
    %s578 = scalar_lea.sflag [#allocation3], 1
    %579 = vsyncpa %s578, 1

</llo_original>
